<compile_context>
chip_gen: v6e
topology: v6e:2x2x1
jax: 0.10.0
libtpu: 0.0.40
codegen_flags: <defaults>
</compile_context>

<pallas_src>
import functools
import math

import jax
import jax.numpy as jnp
import numpy as np
from jax.experimental import pallas as pl
from jax.experimental.pallas import tpu as pltpu


def _round_up(x, m):
    return ((x + m - 1) // m) * m


def _timestep_embedder_kernel(t_ref, w1c_ref, w1s_ref, b1_ref, w2_ref, b2_ref,
                              out_ref, *, half, freq_scale):
    """One batch tile of the full TimestepEmbedder forward.

    t_ref:    (TB, 1)      f32 timesteps
    w1c_ref:  (half, Hp)   W1 rows multiplying cos(args)   (f32 or bf16)
    w1s_ref:  (half, Hp)   W1 rows multiplying sin(args)   (f32 or bf16)
    b1_ref:   (1, Hp)      f32
    w2_ref:   (Hp, Hp)     (f32 or bf16)
    b2_ref:   (1, Hp)      f32
    out_ref:  (TB, Hp)     f32
    """
    # Frequency table computed in-kernel (EUP exp; no extra input DMA).
    lane = jax.lax.broadcasted_iota(jnp.int32, (1, half), 1).astype(jnp.float32)
    freqs = jnp.exp(freq_scale * lane)                      # (1, half)

    args = t_ref[...] * freqs                               # (TB, half) f32
    cos_e = jnp.cos(args)
    sin_e = jnp.sin(args)

    # First linear, split over the cos/sin halves of W1 — avoids the lane-axis
    # concatenate; both dots accumulate in f32 on the MXU.
    w_dtype = w1c_ref.dtype
    h = jnp.dot(cos_e.astype(w_dtype), w1c_ref[...],
                preferred_element_type=jnp.float32)
    h += jnp.dot(sin_e.astype(w_dtype), w1s_ref[...],
                 preferred_element_type=jnp.float32)
    h += b1_ref[...]

    # SiLU in f32 (v5e has no bf16 VPU/EUP path).
    h = h * jax.nn.sigmoid(h)

    out = jnp.dot(h.astype(w_dtype), w2_ref[...],
                  preferred_element_type=jnp.float32) + b2_ref[...]
    out_ref[...] = out.astype(out_ref.dtype)


def timestep_embedder_forward(t, w1, b1, w2, b2, *,
                              frequency_embedding_size=256,
                              max_period=10000,
                              block_b=256):
    """t: (B,) timesteps.  w1: (freq, H), b1: (H,), w2: (H, H), b2: (H,).

    Weights may be f32 or bf16; activations / accumulation stay f32.
    Returns (B, H) f32, matching the PyTorch module's output.
    """
    B = t.shape[0]
    H = w2.shape[1]
    half = frequency_embedding_size // 2

    # --- lane-dense output: pad H up to a multiple of 128.  Zero-padded weight
    #     columns/rows and biases contribute nothing; padded output columns are
    #     sliced off below. ---
    Hp = max(_round_up(H, 128), 128)

    # Split W1 into the rows multiplying cos(args) and sin(args).  For odd
    # frequency_embedding_size the PyTorch zero-pad column multiplies W1's last
    # row and contributes nothing, so dropping it here is exact.
    w1c = w1[:half, :]
    w1s = w1[half:2 * half, :]
    if Hp != H:
        w1c = jnp.pad(w1c, ((0, 0), (0, Hp - H)))
        w1s = jnp.pad(w1s, ((0, 0), (0, Hp - H)))
        w2 = jnp.pad(w2, ((0, Hp - H), (0, Hp - H)))
        b1 = jnp.pad(b1, (0, Hp - H))
        b2 = jnp.pad(b2, (0, Hp - H))

    b1_2d = b1.reshape(1, Hp).astype(jnp.float32)
    b2_2d = b2.reshape(1, Hp).astype(jnp.float32)

    # --- batch tiling: pad B to a multiple of the (8-aligned) batch tile so
    #     the grid pipeline double-buffers t/out while weights stay resident. ---
    TB = min(_round_up(block_b, 8), _round_up(B, 8))
    Bp = _round_up(B, TB)
    t2d = t.astype(jnp.float32).reshape(B, 1)
    if Bp != B:
        t2d = jnp.pad(t2d, ((0, Bp - B), (0, 0)))

    grid = (Bp // TB,)
    kernel = functools.partial(
        _timestep_embedder_kernel,
        half=half,
        freq_scale=-math.log(max_period) / half)

    w_bytes = ((w1c.size + w1s.size + w2.size) * w2.dtype.itemsize
               + 2 * Hp * 4)
    io_bytes = Bp * 4 + Bp * Hp * 4
    cost = pl.CostEstimate(
        flops=2 * Bp * (2 * half * Hp + Hp * Hp),
        transcendentals=Bp * (2 * half + Hp) + half,
        bytes_accessed=w_bytes + io_bytes)

    # VMEM budget: resident weights (x2 for safety) + double-buffered t/out
    # tiles + slack.  Explicit limit keeps the budget valid on v7x (64 MiB).
    vmem_needed = 2 * w_bytes + 4 * TB * (1 + Hp) * 4 + (2 << 20)
    vmem_limit = int(min(max(vmem_needed, 16 * 2**20), 60 * 2**20))

    out = pl.pallas_call(
        kernel,
        out_shape=jax.ShapeDtypeStruct((Bp, Hp), jnp.float32),
        grid_spec=pltpu.PrefetchScalarGridSpec(
            num_scalar_prefetch=0,
            grid=grid,
            in_specs=[
                pl.BlockSpec((TB, 1), lambda i: (i, 0)),       # t tile
                pl.BlockSpec((half, Hp), lambda i: (0, 0)),    # W1 (cos rows)
                pl.BlockSpec((half, Hp), lambda i: (0, 0)),    # W1 (sin rows)
                pl.BlockSpec((1, Hp), lambda i: (0, 0)),       # b1
                pl.BlockSpec((Hp, Hp), lambda i: (0, 0)),      # W2
                pl.BlockSpec((1, Hp), lambda i: (0, 0)),       # b2
            ],
            out_specs=pl.BlockSpec((TB, Hp), lambda i: (i, 0)),
        ),
        compiler_params=pltpu.CompilerParams(
            dimension_semantics=("parallel",),
            vmem_limit_bytes=vmem_limit),
        cost_estimate=cost,
    )(t2d, w1c, w1s, b1_2d, w2, b2_2d)

    return out[:B, :H]


def _reference_forward(t, w1, b1, w2, b2, frequency_embedding_size=256,
                       max_period=10000):
    half = frequency_embedding_size // 2
    freqs = np.exp(-math.log(max_period) * np.arange(half, dtype=np.float32)
                   / half)
    args = np.asarray(t, np.float32)[:, None] * freqs[None]
    emb = np.concatenate([np.cos(args), np.sin(args)], axis=-1)
    if frequency_embedding_size % 2:
        emb = np.concatenate([emb, np.zeros_like(emb[:, :1])], axis=-1)
    h = emb @ np.asarray(w1) + np.asarray(b1)
    h = h * (1.0 / (1.0 + np.exp(-h)))
    return h @ np.asarray(w2) + np.asarray(b2)


if __name__ == "__main__":
    hidden_size = 32
    frequency_embedding_size = 256
    batch = 8

    key = jax.random.PRNGKey(0)
    k_t, k_w1, k_b1, k_w2, k_b2 = jax.random.split(key, 5)

    # Deterministic synthetic parameters (Linear weights stored as (in, out)).
    w1 = jax.random.normal(k_w1, (frequency_embedding_size, hidden_size),
                           jnp.float32) * 0.02
    b1 = jax.random.normal(k_b1, (hidden_size,), jnp.float32) * 0.02
    w2 = jax.random.normal(k_w2, (hidden_size, hidden_size), jnp.float32) * 0.02
    b2 = jax.random.normal(k_b2, (hidden_size,), jnp.float32) * 0.02

    # Timesteps (like diffusion timesteps).
    t = jax.random.uniform(k_t, (batch,), jnp.float32, 0.0, 1000.0)

    ref = _reference_forward(np.asarray(t), np.asarray(w1), np.asarray(b1),
                             np.asarray(w2), np.asarray(b2),
                             frequency_embedding_size)

    # f32-weight path: tight check against the NumPy reference.
    out_f32 = jax.block_until_ready(
        timestep_embedder_forward(
            t, w1, b1, w2, b2,
            frequency_embedding_size=frequency_embedding_size))
    assert out_f32.shape == (batch, hidden_size)
    np.testing.assert_allclose(np.asarray(out_f32), ref, rtol=1e-4, atol=1e-4)

    # bf16-weight path (halves weight DMA); activations/accumulation stay f32,
    # so only a bf16-rounding-level tolerance is needed.
    out_bf16 = jax.block_until_ready(
        timestep_embedder_forward(
            t, w1.astype(jnp.bfloat16), b1, w2.astype(jnp.bfloat16), b2,
            frequency_embedding_size=frequency_embedding_size))
    np.testing.assert_allclose(np.asarray(out_bf16), ref, rtol=3e-2, atol=3e-2)

    print("KERNEL_OK")
</pallas_src>

<mosaic_0001>
module attributes {stable_mosaic.version = 11 : i64} {
  func.func @_timestep_embedder_kernel(%arg0: i32, %arg1: memref<8x1xf32, #tpu.memory_space<vmem>>, %arg2: memref<128x128xf32, #tpu.memory_space<vmem>>, %arg3: memref<128x128xf32, #tpu.memory_space<vmem>>, %arg4: memref<1x128xf32, #tpu.memory_space<vmem>>, %arg5: memref<128x128xf32, #tpu.memory_space<vmem>>, %arg6: memref<1x128xf32, #tpu.memory_space<vmem>>, %arg7: memref<8x128xf32, #tpu.memory_space<vmem>>) attributes {dimension_semantics = [#tpu.dimension_semantics<parallel>], iteration_bounds = array<i64: 1>, scalar_prefetch = 0 : i64, scratch_operands = 0 : i64, tpu.core_type = #tpu.core_type<tc>, window_params = [{transform_indices = @transform_0, window_bounds = array<i64: 8, 1>}, {pipeline_mode = #tpu.pipeline_mode<synchronous>, transform_indices = @transform_1, window_bounds = array<i64: 128, 128>}, {pipeline_mode = #tpu.pipeline_mode<synchronous>, transform_indices = @transform_2, window_bounds = array<i64: 128, 128>}, {pipeline_mode = #tpu.pipeline_mode<synchronous>, transform_indices = @transform_3, window_bounds = array<i64: 1, 128>}, {pipeline_mode = #tpu.pipeline_mode<synchronous>, transform_indices = @transform_4, window_bounds = array<i64: 128, 128>}, {pipeline_mode = #tpu.pipeline_mode<synchronous>, transform_indices = @transform_5, window_bounds = array<i64: 1, 128>}, {transform_indices = @transform_6, window_bounds = array<i64: 8, 128>}]} {
    %0 = tpu.iota {dimensions = array<i32: 1>} : vector<1x128xi32>
    %1 = arith.sitofp %0 : vector<1x128xi32> to vector<1x128xf32>
    %cst = arith.constant -0.0719557852 : f32
    %2 = vector.broadcast %cst : f32 to vector<1x128xf32>
    %3 = arith.mulf %2, %1 : vector<1x128xf32>
    %4 = math.exp %3 : vector<1x128xf32>
    %c0 = arith.constant 0 : index
    %c0_0 = arith.constant 0 : index
    %5 = vector.load %arg1[%c0, %c0_0] : memref<8x1xf32, #tpu.memory_space<vmem>>, vector<8x1xf32>
    %6 = vector.broadcast %5 : vector<8x1xf32> to vector<8x128xf32>
    %7 = vector.broadcast %4 : vector<1x128xf32> to vector<8x128xf32>
    %8 = arith.mulf %6, %7 : vector<8x128xf32>
    %9 = math.cos %8 : vector<8x128xf32>
    %10 = math.sin %8 : vector<8x128xf32>
    %c0_1 = arith.constant 0 : index
    %c0_2 = arith.constant 0 : index
    %11 = vector.load %arg2[%c0_1, %c0_2] : memref<128x128xf32, #tpu.memory_space<vmem>>, vector<128x128xf32>
    %cst_3 = arith.constant dense<0.000000e+00> : vector<8x128xf32>
    %12 = tpu.matmul %9, %11, %cst_3 {dimension_numbers = #tpu.dot_dimension_numbers<[1], [0], [0], [1], [0, 0, 1, 1], [], []>} : vector<8x128xf32>, vector<128x128xf32>, vector<8x128xf32> -> vector<8x128xf32>
    %c0_4 = arith.constant 0 : index
    %c0_5 = arith.constant 0 : index
    %13 = vector.load %arg3[%c0_4, %c0_5] : memref<128x128xf32, #tpu.memory_space<vmem>>, vector<128x128xf32>
    %cst_6 = arith.constant dense<0.000000e+00> : vector<8x128xf32>
    %14 = tpu.matmul %10, %13, %cst_6 {dimension_numbers = #tpu.dot_dimension_numbers<[1], [0], [0], [1], [0, 0, 1, 1], [], []>} : vector<8x128xf32>, vector<128x128xf32>, vector<8x128xf32> -> vector<8x128xf32>
    %15 = arith.addf %12, %14 : vector<8x128xf32>
    %c0_7 = arith.constant 0 : index
    %c0_8 = arith.constant 0 : index
    %16 = vector.load %arg4[%c0_7, %c0_8] : memref<1x128xf32, #tpu.memory_space<vmem>>, vector<1x128xf32>
    %17 = vector.broadcast %16 : vector<1x128xf32> to vector<8x128xf32>
    %18 = arith.addf %15, %17 : vector<8x128xf32>
    %19 = arith.negf %18 : vector<8x128xf32>
    %20 = math.exp %19 : vector<8x128xf32>
    %cst_9 = arith.constant 1.000000e+00 : f32
    %21 = vector.broadcast %cst_9 : f32 to vector<8x128xf32>
    %22 = arith.addf %21, %20 : vector<8x128xf32>
    %23 = arith.divf %21, %22 : vector<8x128xf32>
    %24 = arith.mulf %18, %23 : vector<8x128xf32>
    %c0_10 = arith.constant 0 : index
    %c0_11 = arith.constant 0 : index
    %25 = vector.load %arg5[%c0_10, %c0_11] : memref<128x128xf32, #tpu.memory_space<vmem>>, vector<128x128xf32>
    %cst_12 = arith.constant dense<0.000000e+00> : vector<8x128xf32>
    %26 = tpu.matmul %24, %25, %cst_12 {dimension_numbers = #tpu.dot_dimension_numbers<[1], [0], [0], [1], [0, 0, 1, 1], [], []>} : vector<8x128xf32>, vector<128x128xf32>, vector<8x128xf32> -> vector<8x128xf32>
    %c0_13 = arith.constant 0 : index
    %c0_14 = arith.constant 0 : index
    %27 = vector.load %arg6[%c0_13, %c0_14] : memref<1x128xf32, #tpu.memory_space<vmem>>, vector<1x128xf32>
    %28 = vector.broadcast %27 : vector<1x128xf32> to vector<8x128xf32>
    %29 = arith.addf %26, %28 : vector<8x128xf32>
    %c0_15 = arith.constant 0 : index
    %c0_16 = arith.constant 0 : index
    %30 = vector.load %arg7[%c0_15, %c0_16] : memref<8x128xf32, #tpu.memory_space<vmem>>, vector<8x128xf32>
    tpu.vector_store %arg7[%c0_15, %c0_16], %29 {strides = array<i32>} : memref<8x128xf32, #tpu.memory_space<vmem>>, vector<8x128xf32>,
    return
  }
  func.func @transform_0(%arg0: i32) -> (i32, i32) {
    %c0_i32 = arith.constant 0 : i32
    %c0_i32_0 = arith.constant 0 : i32
    return %arg0, %c0_i32 : i32, i32
  }
  func.func @transform_1(%arg0: i32) -> (i32, i32) {
    %c0_i32 = arith.constant 0 : i32
    %c0_i32_0 = arith.constant 0 : i32
    %c0_i32_1 = arith.constant 0 : i32
    return %c0_i32, %c0_i32_0 : i32, i32
  }
  func.func @transform_2(%arg0: i32) -> (i32, i32) {
    %c0_i32 = arith.constant 0 : i32
    %c0_i32_0 = arith.constant 0 : i32
    %c0_i32_1 = arith.constant 0 : i32
    return %c0_i32, %c0_i32_0 : i32, i32
  }
  func.func @transform_3(%arg0: i32) -> (i32, i32) {
    %c0_i32 = arith.constant 0 : i32
    %c0_i32_0 = arith.constant 0 : i32
    %c0_i32_1 = arith.constant 0 : i32
    return %c0_i32, %c0_i32_0 : i32, i32
  }
  func.func @transform_4(%arg0: i32) -> (i32, i32) {
    %c0_i32 = arith.constant 0 : i32
    %c0_i32_0 = arith.constant 0 : i32
    %c0_i32_1 = arith.constant 0 : i32
    return %c0_i32, %c0_i32_0 : i32, i32
  }
  func.func @transform_5(%arg0: i32) -> (i32, i32) {
    %c0_i32 = arith.constant 0 : i32
    %c0_i32_0 = arith.constant 0 : i32
    %c0_i32_1 = arith.constant 0 : i32
    return %c0_i32, %c0_i32_0 : i32, i32
  }
  func.func @transform_6(%arg0: i32) -> (i32, i32) {
    %c0_i32 = arith.constant 0 : i32
    %c0_i32_0 = arith.constant 0 : i32
    return %arg0, %c0_i32 : i32, i32
  }
}

</mosaic_0001>

<llo_original>
// kernel: tpu_custom_call.1
$region0: #{tpu_custom_call.1}
  #allocation0 [shape = 'u32[]', space=smem, size = 0x4, offset = 0x4, fixed_abs, tag = 'smem constant byte address 0x4 - core index']
  #allocation1 [shape = 'u32[144,128]{1,0:T(1,128)}', space=vmem, size = 0x12000, scoped, tag = 'internal scratch']
  %s0 = inlined_call_operand.vmem [shape: f32[8,1], index: 0, kind: input, shape index: {}]
  %s1 = inlined_call_operand.hbm [shape: f32[128,128], index: 1, kind: input, shape index: {}]
  %s2 = inlined_call_operand.hbm [shape: f32[128,128], index: 2, kind: input, shape index: {}]
  %s3 = inlined_call_operand.vmem [shape: f32[1,128], index: 3, kind: input, shape index: {}]
  %s4 = inlined_call_operand.hbm [shape: f32[128,128], index: 4, kind: input, shape index: {}]
  %s5 = inlined_call_operand.vmem [shape: f32[1,128], index: 5, kind: input, shape index: {}]
  %s6 = inlined_call_operand.hbm [shape: f32[8,128], index: 6, kind: output, shape index: {}]
  %s7 = sld [smem:[#allocation0]]
  $region46: #{tpu_custom_call.1} parent=0
    _
  %s9 = ssub.s32 1, %s7
  %s10 = scalar_select 0, %s9, %s7
  $region1: #{tpu_custom_call.1} parent=0
    #allocation2 [shape = 'u8[65536]{0}', space=vmem, size = 0x10000, scoped, tag = 'input window, operand 1, single buffered']
    #allocation3 [shape = 's32[1]{0}', space=sflag, size = 0x4, scoped, tag = 'scoped memory for tpu_custom_call.1']
    #allocation4 [shape = 's32[1]{0}', space=sflag, size = 0x4, scoped, tag = 'scoped memory for tpu_custom_call.1']
    #allocation5 [shape = 'u8[65536]{0}', space=vmem, size = 0x10000, scoped, tag = 'input window, operand 2, single buffered']
    #allocation6 [shape = 's32[1]{0}', space=sflag, size = 0x4, scoped, tag = 'scoped memory for tpu_custom_call.1']
    #allocation7 [shape = 'u8[65536]{0}', space=vmem, size = 0x10000, scoped, tag = 'input window, operand 4, single buffered']
    #allocation8 [shape = 'u8[4096]{0}', space=vmem, size = 0x1000, scoped, tag = 'output window, operand 0, single buffered']
    %11 = vsyncpa [#allocation3], 0
    %12 = vsyncpa [#allocation6], 0
    %13 = vsyncpa [#allocation4], 0
    // Predicated region
    $region2: #{tpu_custom_call.1} parent=1 // pred_check
      _
    $region3: #{tpu_custom_call.1} parent=1 // pred_check_branch
      %15 = sbr.rel (0) target = $region5
    $region4: #{tpu_custom_call.1} parent=1 // pred_region
      _
    $region5: #{tpu_custom_call.1} parent=1 // pred_fallthru
      _
    // Predicated region
    $region6: #{tpu_custom_call.1} parent=1 // pred_check
      _
    $region7: #{tpu_custom_call.1} parent=1 // pred_check_branch
      %17 = sbr.rel (0) target = $region9
    $region8: #{tpu_custom_call.1} parent=1 // pred_region
      %s19 = ssub.s32 2048, 2048
      %20 = vsyncadd [#allocation3], %s19
      %s21 = sshll.u32 [#allocation2], 4
      %s22 = int_to_ptr.vmem [resolvable:$true] %s21
      %27 = dma.hbm_to_vmem [thread:$0]  %s1, 2048, %s22, [#allocation3], 128, 128, 8
    $region9: #{tpu_custom_call.1} parent=1 // pred_fallthru
      _
    // Predicated region
    $region10: #{tpu_custom_call.1} parent=1 // pred_check
      _
    $region11: #{tpu_custom_call.1} parent=1 // pred_check_branch
      %29 = sbr.rel (0) target = $region13
    $region12: #{tpu_custom_call.1} parent=1 // pred_region
      %s31 = ssub.s32 2048, 2048
      %32 = vsyncadd [#allocation6], %s31
      %s33 = sshll.u32 [#allocation5], 4
      %s34 = int_to_ptr.vmem [resolvable:$true] %s33
      %39 = dma.hbm_to_vmem [thread:$0]  %s2, 2048, %s34, [#allocation6], 128, 128, 8
    $region13: #{tpu_custom_call.1} parent=1 // pred_fallthru
      _
    // Predicated region
    $region14: #{tpu_custom_call.1} parent=1 // pred_check
      _
    $region15: #{tpu_custom_call.1} parent=1 // pred_check_branch
      %41 = sbr.rel (0) target = $region17
    $region16: #{tpu_custom_call.1} parent=1 // pred_region
      _
    $region17: #{tpu_custom_call.1} parent=1 // pred_fallthru
      _
    // Predicated region
    $region18: #{tpu_custom_call.1} parent=1 // pred_check
      _
    $region19: #{tpu_custom_call.1} parent=1 // pred_check_branch
      %43 = sbr.rel (0) target = $region21
    $region20: #{tpu_custom_call.1} parent=1 // pred_region
      %s45 = ssub.s32 2048, 2048
      %46 = vsyncadd [#allocation6], %s45
      %s47 = sshll.u32 [#allocation7], 4
      %s48 = int_to_ptr.vmem [resolvable:$true] %s47
      %53 = dma.hbm_to_vmem [thread:$0]  %s4, 2048, %s48, [#allocation6], 128, 128, 8
    $region21: #{tpu_custom_call.1} parent=1 // pred_fallthru
      _
    // Predicated region
    $region22: #{tpu_custom_call.1} parent=1 // pred_check
      _
    $region23: #{tpu_custom_call.1} parent=1 // pred_check_branch
      %55 = sbr.rel (0) target = $region25
    $region24: #{tpu_custom_call.1} parent=1 // pred_region
      _
    $region25: #{tpu_custom_call.1} parent=1 // pred_fallthru
      _
    // Predicated region
    $region26: #{tpu_custom_call.1} parent=1 // pred_check
      _
    $region27: #{tpu_custom_call.1} parent=1 // pred_check_branch
      %57 = sbr.rel (0) target = $region29
    $region28: #{tpu_custom_call.1} parent=1 // pred_region
      %58 = dma.done [#allocation3], 2048
    $region29: #{tpu_custom_call.1} parent=1 // pred_fallthru
      _
    // Predicated region
    $region30: #{tpu_custom_call.1} parent=1 // pred_check
      _
    $region31: #{tpu_custom_call.1} parent=1 // pred_check_branch
      %60 = sbr.rel (0) target = $region33
    $region32: #{tpu_custom_call.1} parent=1 // pred_region
      %61 = dma.done [#allocation6], 2048
    $region33: #{tpu_custom_call.1} parent=1 // pred_fallthru
      _
    // Predicated region
    $region34: #{tpu_custom_call.1} parent=1 // pred_check
      _
    $region35: #{tpu_custom_call.1} parent=1 // pred_check_branch
      %63 = sbr.rel (0) target = $region37
    $region36: #{tpu_custom_call.1} parent=1 // pred_region
      %64 = dma.done [#allocation6], 2048
    $region37: #{tpu_custom_call.1} parent=1 // pred_fallthru
      _
    %v65 = vlaneseq
    %v66 = vand.u32 %v65, 127
    %v67 = vcvt.s32.f32 %v66
    %v68 = vmul.f32 %v67, -0.071955785
    %v69 = vmul.f32 %v68, 1.442695
    %v70 = vpow.pop %v69
    %v71 = vld [vmem:[%s0] sm:$0xff]
    %73 = vset.pattern.permute.xlu0 0
    %74 = vperm.xlu0 %73, %v71
    %v75 = vpop.permute.xlu0 %74
    %v77 = vmul.f32 %v75, %v70
    %v78 = vand.u32 2147483647, %v77
    %vm79 = vcmp.le.f32.partialorder %v78, 0.7853982
    %vm80 = vcmp.lt.s32.totalorder %v77, 0
    %v81 = vand.u32 %v77, 2139095040
    %v82 = vshrl.u32 %v81, 23
    %v83 = vsub.s32 %v82, 127
    %v84 = vand.u32 2147483647, %v77
    %v85 = vand.u32 %v84, 8388607
    %v86 = vor.u32 %v85, 8388608
    %v87 = vsub.s32 0, %v86
    %v88 = vadd.s32 %v83, 1
    %vm89 = vcmp.gt.s32.totalorder %v88, 0
    %v90 = vsel %vm89, %v88, 0
    %v91 = vshrl.u32 %v90, 5
    %v92 = vand.u32 %v90, 31
    %v93 = vsub.s32 32, %v92
    %v94 = vshrl.u32 683565275, %v93
    %v95 = vshll.u32 683565275, %v92
    %v96 = vshrl.u32 2475754826, %v93
    %v97 = vor.u32 %v95, %v96
    %v98 = vshll.u32 2475754826, %v92
    %v99 = vshrl.u32 2131351028, %v93
    %v100 = vor.u32 %v98, %v99
    %v101 = vshll.u32 2131351028, %v92
    %v102 = vshrl.u32 2102212464, %v93
    %v103 = vor.u32 %v101, %v102
    %v104 = vshll.u32 2102212464, %v92
    %v105 = vshrl.u32 920167782, %v93
    %v106 = vor.u32 %v104, %v105
    %v107 = vshll.u32 920167782, %v92
    %v108 = vshrl.u32 1326507024, %v93
    %v109 = vor.u32 %v107, %v108
    %vm110 = vcmp.lt.s32.totalorder %v91, 1
    %vm111 = vcmp.lt.s32.totalorder %v91, 2
    %vm112 = vcmp.lt.s32.totalorder %v91, 3
    %vm113 = vcmp.lt.s32.totalorder %v91, 4
    %v114 = vsel %vm110, %v94, %v97
    %v115 = vsel %vm113, %v103, 2102212464
    %v116 = vsel %vm112, %v100, %v115
    %v117 = vsel %vm111, %v114, %v116
    %v118 = vsel %vm110, %v97, %v100
    %v119 = vsel %vm113, %v106, 920167782
    %v120 = vsel %vm112, %v103, %v119
    %v121 = vsel %vm111, %v118, %v120
    %v122 = vsel %vm110, %v100, %v103
    %v123 = vsel %vm113, %v109, 1326507024
    %v124 = vsel %vm112, %v106, %v123
    %v125 = vsel %vm111, %v122, %v124
    %v126 = vshll.u32 %v86, 8
    %v127 = vmul.u32.u64.compose %v126, %v125
    %v128 = vextract.low.u32 %v127
    %v129 = vextract.high.u32 %v127
    %v130 = vmul.u32.u64.compose %v126, %v121
    %v131 = vextract.low.u32 %v130
    %v132 = vextract.high.u32 %v130
    %v133 = vmul.u32 %v126, %v117
    %v134 = vadd.s32 %v129, %v131
    %vm135 = vc.u32 %v129, %v131
    %v136 = vadd.s32 %v132, 1
    %v137 = vsel %vm135, %v136, %v132
    %v138 = vadd.s32 %v133, %v137
    %v139 = vadd.s32 %v138, 536870912
    %v140 = vshrl.u32 %v139, 30
    %v141 = vshll.u32 %v140, 30
    %v142 = vsub.s32 %v138, %v141
    %vm143 = vcmp.lt.s32.totalorder %v142, 0
    %v144 = vsub.s32 0, %v142
    %v145 = vsel %vm143, %v144, %v142
    %v146 = vclz %v145
    %v147 = vsub.s32 %v146, 2
    %vm148 = vcmp.gt.s32.totalorder 0, %v147
    %v149 = vsel %vm148, 0, %v147
    %v150 = vsub.s32 32, %v149
    %v151 = vshll.u32 %v142, %v149
    %v152 = vshrl.u32 %v134, %v150
    %v153 = vor.u32 %v151, %v152
    %v154 = vsub.s32 4294967266, %v149
    %v155 = vadd.s32 %v154, 127
    %v156 = vshll.u32 %v155, 23
    %v157 = vor.u32 4788187, %v156
    %v158 = vand.u32 2147483647, %v157
    %v160 = vcvt.s32.f32 %v153
    %v161 = vmul.f32 %v160, %v158
    %v162 = vxor.u32 %v161, 2147483648
    %v163 = vsel %vm80, %v162, %v161
    %v164 = vsub.s32 4, %v140
    %v165 = vsel %vm80, %v164, %v140
    %v166 = vsel %vm79, %v77, %v163
    %v167 = vsel %vm79, 0, %v165
    %v168 = vcosq.f32.pop %v166
    %v169 = vsinq.f32.pop %v166
    %vm170 = vweird.f32 %v77
    %v171 = vand.u32 %v167, 3
    %vm172 = vcmp.lt.s32.totalorder %v171, 2
    %vm173 = vcmp.eq.s32.totalorder %v171, 0
    %v174 = vxor.u32 %v169, 2147483648
    %v175 = vsel %vm173, %v168, %v174
    %vm176 = vcmp.eq.s32.totalorder %v171, 2
    %v177 = vxor.u32 %v168, 2147483648
    %v178 = vsel %vm176, %v177, %v169
    %v179 = vsel %vm172, %v175, %v178
    %v180 = vsel %vm170, nan, %v179
    %v181 = vand.u32 2147483647, %v77
    %vm182 = vcmp.le.f32.partialorder %v181, 0.7853982
    %vm183 = vcmp.lt.s32.totalorder %v77, 0
    %v184 = vand.u32 %v77, 2139095040
    %v185 = vshrl.u32 %v184, 23
    %v186 = vsub.s32 %v185, 127
    %v187 = vand.u32 2147483647, %v77
    %v188 = vand.u32 %v187, 8388607
    %v189 = vor.u32 %v188, 8388608
    %v190 = vsub.s32 0, %v189
    %v191 = vadd.s32 %v186, 1
    %vm192 = vcmp.gt.s32.totalorder %v191, 0
    %v193 = vsel %vm192, %v191, 0
    %v194 = vshrl.u32 %v193, 5
    %v195 = vand.u32 %v193, 31
    %v196 = vsub.s32 32, %v195
    %v197 = vshrl.u32 683565275, %v196
    %v198 = vshll.u32 683565275, %v195
    %v199 = vshrl.u32 2475754826, %v196
    %v200 = vor.u32 %v198, %v199
    %v201 = vshll.u32 2475754826, %v195
    %v202 = vshrl.u32 2131351028, %v196
    %v203 = vor.u32 %v201, %v202
    %v204 = vshll.u32 2131351028, %v195
    %v205 = vshrl.u32 2102212464, %v196
    %v206 = vor.u32 %v204, %v205
    %v207 = vshll.u32 2102212464, %v195
    %v208 = vshrl.u32 920167782, %v196
    %v209 = vor.u32 %v207, %v208
    %v210 = vshll.u32 920167782, %v195
    %v211 = vshrl.u32 1326507024, %v196
    %v212 = vor.u32 %v210, %v211
    %vm213 = vcmp.lt.s32.totalorder %v194, 1
    %vm214 = vcmp.lt.s32.totalorder %v194, 2
    %vm215 = vcmp.lt.s32.totalorder %v194, 3
    %vm216 = vcmp.lt.s32.totalorder %v194, 4
    %v217 = vsel %vm213, %v197, %v200
    %v218 = vsel %vm216, %v206, 2102212464
    %v219 = vsel %vm215, %v203, %v218
    %v220 = vsel %vm214, %v217, %v219
    %v221 = vsel %vm213, %v200, %v203
    %v222 = vsel %vm216, %v209, 920167782
    %v223 = vsel %vm215, %v206, %v222
    %v224 = vsel %vm214, %v221, %v223
    %v225 = vsel %vm213, %v203, %v206
    %v226 = vsel %vm216, %v212, 1326507024
    %v227 = vsel %vm215, %v209, %v226
    %v228 = vsel %vm214, %v225, %v227
    %v229 = vshll.u32 %v189, 8
    %v230 = vmul.u32.u64.compose %v229, %v228
    %v231 = vextract.low.u32 %v230
    %v232 = vextract.high.u32 %v230
    %v233 = vmul.u32.u64.compose %v229, %v224
    %v234 = vextract.low.u32 %v233
    %v235 = vextract.high.u32 %v233
    %v236 = vmul.u32 %v229, %v220
    %v237 = vadd.s32 %v232, %v234
    %vm238 = vc.u32 %v232, %v234
    %v239 = vadd.s32 %v235, 1
    %v240 = vsel %vm238, %v239, %v235
    %v241 = vadd.s32 %v236, %v240
    %v242 = vadd.s32 %v241, 536870912
    %v243 = vshrl.u32 %v242, 30
    %v244 = vshll.u32 %v243, 30
    %v245 = vsub.s32 %v241, %v244
    %vm246 = vcmp.lt.s32.totalorder %v245, 0
    %v247 = vsub.s32 0, %v245
    %v248 = vsel %vm246, %v247, %v245
    %v249 = vclz %v248
    %v250 = vsub.s32 %v249, 2
    %vm251 = vcmp.gt.s32.totalorder 0, %v250
    %v252 = vsel %vm251, 0, %v250
    %v253 = vsub.s32 32, %v252
    %v254 = vshll.u32 %v245, %v252
    %v255 = vshrl.u32 %v237, %v253
    %v256 = vor.u32 %v254, %v255
    %v257 = vsub.s32 4294967266, %v252
    %v258 = vadd.s32 %v257, 127
    %v259 = vshll.u32 %v258, 23
    %v260 = vor.u32 4788187, %v259
    %v261 = vand.u32 2147483647, %v260
    %v263 = vcvt.s32.f32 %v256
    %v264 = vmul.f32 %v263, %v261
    %v265 = vxor.u32 %v264, 2147483648
    %v266 = vsel %vm183, %v265, %v264
    %v267 = vsub.s32 4, %v243
    %v268 = vsel %vm183, %v267, %v243
    %v269 = vsel %vm182, %v77, %v266
    %v270 = vsel %vm182, 0, %v268
    %v271 = vcosq.f32.pop %v269
    %v272 = vsinq.f32.pop %v269
    %vm273 = vweird.f32 %v77
    %v274 = vadd.s32 %v270, 3
    %v275 = vand.u32 %v274, 3
    %vm276 = vcmp.lt.s32.totalorder %v275, 2
    %vm277 = vcmp.eq.s32.totalorder %v275, 0
    %v278 = vxor.u32 %v272, 2147483648
    %v279 = vsel %vm277, %v271, %v278
    %vm280 = vcmp.eq.s32.totalorder %v275, 2
    %v281 = vxor.u32 %v271, 2147483648
    %v282 = vsel %vm280, %v281, %v272
    %v283 = vsel %vm276, %v279, %v282
    %v284 = vsel %vm273, nan, %v283
    %v285 = vld [vmem:[#allocation2] sm:$0xff]
    %v286 = vld [vmem:[#allocation2 + $0x8] sm:$0xff]
    %v287 = vld [vmem:[#allocation2 + $0x10] sm:$0xff]
    %v288 = vld [vmem:[#allocation2 + $0x18] sm:$0xff]
    %v289 = vld [vmem:[#allocation2 + $0x20] sm:$0xff]
    %v290 = vld [vmem:[#allocation2 + $0x28] sm:$0xff]
    %v291 = vld [vmem:[#allocation2 + $0x30] sm:$0xff]
    %v292 = vld [vmem:[#allocation2 + $0x38] sm:$0xff]
    %v293 = vld [vmem:[#allocation2 + $0x40] sm:$0xff]
    %v294 = vld [vmem:[#allocation2 + $0x48] sm:$0xff]
    %v295 = vld [vmem:[#allocation2 + $0x50] sm:$0xff]
    %v296 = vld [vmem:[#allocation2 + $0x58] sm:$0xff]
    %v297 = vld [vmem:[#allocation2 + $0x60] sm:$0xff]
    %v298 = vld [vmem:[#allocation2 + $0x68] sm:$0xff]
    %v299 = vld [vmem:[#allocation2 + $0x70] sm:$0xff]
    %v300 = vld [vmem:[#allocation2 + $0x78] sm:$0xff]
    %v301 = vld [vmem:[#allocation5] sm:$0xff]
    %v302 = vld [vmem:[#allocation5 + $0x8] sm:$0xff]
    %v303 = vld [vmem:[#allocation5 + $0x10] sm:$0xff]
    %v304 = vld [vmem:[#allocation5 + $0x18] sm:$0xff]
    %v305 = vld [vmem:[#allocation5 + $0x20] sm:$0xff]
    %v306 = vld [vmem:[#allocation5 + $0x28] sm:$0xff]
    %v307 = vld [vmem:[#allocation5 + $0x30] sm:$0xff]
    %v308 = vld [vmem:[#allocation5 + $0x38] sm:$0xff]
    %v309 = vld [vmem:[#allocation5 + $0x40] sm:$0xff]
    %v310 = vld [vmem:[#allocation5 + $0x48] sm:$0xff]
    %v311 = vld [vmem:[#allocation5 + $0x50] sm:$0xff]
    %v312 = vld [vmem:[#allocation5 + $0x58] sm:$0xff]
    %v313 = vld [vmem:[#allocation5 + $0x60] sm:$0xff]
    %v314 = vld [vmem:[#allocation5 + $0x68] sm:$0xff]
    %v315 = vld [vmem:[#allocation5 + $0x70] sm:$0xff]
    %v316 = vld [vmem:[#allocation5 + $0x78] sm:$0xff]
    %317 = vmatprep.subr.mxu0 0.0
    %318 = vmatpush1.msra.mxu0 %v316
    %319 = vmatprep.subr.mxu0 0.0
    %320 = vmatpush1.msra.mxu0 %v315
    %321 = vmatprep.subr.mxu0 0.0
    %322 = vmatpush1.msra.mxu0 %v314
    %323 = vmatprep.subr.mxu0 0.0
    %324 = vmatpush1.msra.mxu0 %v313
    %325 = vmatprep.subr.mxu0 0.0
    %326 = vmatpush1.msra.mxu0 %v312
    %327 = vmatprep.subr.mxu0 0.0
    %328 = vmatpush1.msra.mxu0 %v311
    %329 = vmatprep.subr.mxu0 0.0
    %330 = vmatpush1.msra.mxu0 %v310
    %331 = vmatprep.subr.mxu0 0.0
    %332 = vmatpush1.msra.mxu0 %v309
    %333 = vmatprep.subr.mxu0 0.0
    %334 = vmatpush1.msra.mxu0 %v308
    %335 = vmatprep.subr.mxu0 0.0
    %336 = vmatpush1.msra.mxu0 %v307
    %337 = vmatprep.subr.mxu0 0.0
    %338 = vmatpush1.msra.mxu0 %v306
    %339 = vmatprep.subr.mxu0 0.0
    %340 = vmatpush1.msra.mxu0 %v305
    %341 = vmatprep.subr.mxu0 0.0
    %342 = vmatpush1.msra.mxu0 %v304
    %343 = vmatprep.subr.mxu0 0.0
    %344 = vmatpush1.msra.mxu0 %v303
    %345 = vmatprep.subr.mxu0 0.0
    %346 = vmatpush1.msra.mxu0 %v302
    %347 = vmatprep.subr.mxu0 0.0
    %348 = vmatpush1.msra.mxu0 %v301
    %349 = vmatprep.subr.mxu0 0.0
    %350 = vmatpush2.msra.mxu0 0.0
    %351 = vmatprep.subr.mxu0 0.0
    %352 = vmatpush2.msra.mxu0 0.0
    %353 = vmatprep.subr.mxu0 0.0
    %354 = vmatpush2.msra.mxu0 0.0
    %355 = vmatprep.subr.mxu0 0.0
    %356 = vmatpush2.msra.mxu0 0.0
    %357 = vmatprep.subr.mxu0 0.0
    %358 = vmatpush2.msra.mxu0 0.0
    %359 = vmatprep.subr.mxu0 0.0
    %360 = vmatpush2.msra.mxu0 0.0
    %361 = vmatprep.subr.mxu0 0.0
    %362 = vmatpush2.msra.mxu0 0.0
    %363 = vmatprep.subr.mxu0 0.0
    %364 = vmatpush2.msra.mxu0 0.0
    %365 = vmatprep.subr.mxu0 0.0
    %366 = vmatpush2.msra.mxu0 0.0
    %367 = vmatprep.subr.mxu0 0.0
    %368 = vmatpush2.msra.mxu0 0.0
    %369 = vmatprep.subr.mxu0 0.0
    %370 = vmatpush2.msra.mxu0 0.0
    %371 = vmatprep.subr.mxu0 0.0
    %372 = vmatpush2.msra.mxu0 0.0
    %373 = vmatprep.subr.mxu0 0.0
    %374 = vmatpush2.msra.mxu0 0.0
    %375 = vmatprep.subr.mxu0 0.0
    %376 = vmatpush2.msra.mxu0 0.0
    %377 = vmatprep.subr.mxu0 0.0
    %378 = vmatpush2.msra.mxu0 0.0
    %379 = vmatprep.subr.mxu0 0.0
    %380 = vmatpush2.msra.mxu0 0.0
    %381 = vmatprep.mubr.f32.mxu0 0.0
    %382 = vmatmul.mubr.f32.gmra.mxu0 %v284
    %v383 = vpop.f32.mrf.mxu0
    %v384 = vadd.f32 0.0, %v383
    %v385 = vpop.f32.mrf.mxu0
    %386 = vdwg.mxu0
    %387 = vmatprep.subr.mxu0 0.0
    %388 = vmatpush1.msra.mxu0 %v300
    %389 = vmatprep.subr.mxu0 0.0
    %390 = vmatpush1.msra.mxu0 %v299
    %391 = vmatprep.subr.mxu0 0.0
    %392 = vmatpush1.msra.mxu0 %v298
    %393 = vmatprep.subr.mxu0 0.0
    %394 = vmatpush1.msra.mxu0 %v297
    %395 = vmatprep.subr.mxu0 0.0
    %396 = vmatpush1.msra.mxu0 %v296
    %397 = vmatprep.subr.mxu0 0.0
    %398 = vmatpush1.msra.mxu0 %v295
    %399 = vmatprep.subr.mxu0 0.0
    %400 = vmatpush1.msra.mxu0 %v294
    %401 = vmatprep.subr.mxu0 0.0
    %402 = vmatpush1.msra.mxu0 %v293
    %403 = vmatprep.subr.mxu0 0.0
    %404 = vmatpush1.msra.mxu0 %v292
    %405 = vmatprep.subr.mxu0 0.0
    %406 = vmatpush1.msra.mxu0 %v291
    %407 = vmatprep.subr.mxu0 0.0
    %408 = vmatpush1.msra.mxu0 %v290
    %409 = vmatprep.subr.mxu0 0.0
    %410 = vmatpush1.msra.mxu0 %v289
    %411 = vmatprep.subr.mxu0 0.0
    %412 = vmatpush1.msra.mxu0 %v288
    %413 = vmatprep.subr.mxu0 0.0
    %414 = vmatpush1.msra.mxu0 %v287
    %415 = vmatprep.subr.mxu0 0.0
    %416 = vmatpush1.msra.mxu0 %v286
    %417 = vmatprep.subr.mxu0 0.0
    %418 = vmatpush1.msra.mxu0 %v285
    %419 = vmatprep.subr.mxu0 0.0
    %420 = vmatpush2.msra.mxu0 0.0
    %421 = vmatprep.subr.mxu0 0.0
    %422 = vmatpush2.msra.mxu0 0.0
    %423 = vmatprep.subr.mxu0 0.0
    %424 = vmatpush2.msra.mxu0 0.0
    %425 = vmatprep.subr.mxu0 0.0
    %426 = vmatpush2.msra.mxu0 0.0
    %427 = vmatprep.subr.mxu0 0.0
    %428 = vmatpush2.msra.mxu0 0.0
    %429 = vmatprep.subr.mxu0 0.0
    %430 = vmatpush2.msra.mxu0 0.0
    %431 = vmatprep.subr.mxu0 0.0
    %432 = vmatpush2.msra.mxu0 0.0
    %433 = vmatprep.subr.mxu0 0.0
    %434 = vmatpush2.msra.mxu0 0.0
    %435 = vmatprep.subr.mxu0 0.0
    %436 = vmatpush2.msra.mxu0 0.0
    %437 = vmatprep.subr.mxu0 0.0
    %438 = vmatpush2.msra.mxu0 0.0
    %439 = vmatprep.subr.mxu0 0.0
    %440 = vmatpush2.msra.mxu0 0.0
    %441 = vmatprep.subr.mxu0 0.0
    %442 = vmatpush2.msra.mxu0 0.0
    %443 = vmatprep.subr.mxu0 0.0
    %444 = vmatpush2.msra.mxu0 0.0
    %445 = vmatprep.subr.mxu0 0.0
    %446 = vmatpush2.msra.mxu0 0.0
    %447 = vmatprep.subr.mxu0 0.0
    %448 = vmatpush2.msra.mxu0 0.0
    %449 = vmatprep.subr.mxu0 0.0
    %450 = vmatpush2.msra.mxu0 0.0
    %451 = vmatprep.mubr.f32.mxu0 0.0
    %452 = vmatmul.mubr.f32.gmra.mxu0 %v180
    %v453 = vpop.f32.mrf.mxu0
    %v454 = vadd.f32 %v384, %v453
    %v455 = vpop.f32.mrf.mxu0
    %456 = vdwg.mxu0
    %v457 = vld [vmem:[%s3] sm:$0x1]
    %v459 = vlaneseq
    %v460 = vshrl.u32 %v459, 7
    %v461 = vsub.s32 0, %v460
    %v462 = vrot.slane %v457, %v461
    %v464 = vadd.f32 %v454, %v462
    %v465 = vxor.u32 %v464, 2147483648
    %v466 = vmul.f32 %v465, 1.442695
    %v467 = vpow.pop %v466
    %v468 = vadd.f32 %v467, 1.0
    %v469 = vrcp.pop %v468
    %v470 = vmul.f32 1.0, %v469
    %v471 = vmul.f32 %v464, %v470
    %v472 = vld [vmem:[#allocation7] sm:$0xff]
    %v473 = vld [vmem:[#allocation7 + $0x8] sm:$0xff]
    %v474 = vld [vmem:[#allocation7 + $0x10] sm:$0xff]
    %v475 = vld [vmem:[#allocation7 + $0x18] sm:$0xff]
    %v476 = vld [vmem:[#allocation7 + $0x20] sm:$0xff]
    %v477 = vld [vmem:[#allocation7 + $0x28] sm:$0xff]
    %v478 = vld [vmem:[#allocation7 + $0x30] sm:$0xff]
    %v479 = vld [vmem:[#allocation7 + $0x38] sm:$0xff]
    %v480 = vld [vmem:[#allocation7 + $0x40] sm:$0xff]
    %v481 = vld [vmem:[#allocation7 + $0x48] sm:$0xff]
    %v482 = vld [vmem:[#allocation7 + $0x50] sm:$0xff]
    %v483 = vld [vmem:[#allocation7 + $0x58] sm:$0xff]
    %v484 = vld [vmem:[#allocation7 + $0x60] sm:$0xff]
    %v485 = vld [vmem:[#allocation7 + $0x68] sm:$0xff]
    %v486 = vld [vmem:[#allocation7 + $0x70] sm:$0xff]
    %v487 = vld [vmem:[#allocation7 + $0x78] sm:$0xff]
    %v488 = vld [vmem:[%s5] sm:$0x1]
    %v490 = vlaneseq
    %v491 = vshrl.u32 %v490, 7
    %v492 = vsub.s32 0, %v491
    %v493 = vrot.slane %v488, %v492
    %495 = vmatprep.subr.mxu0 0.0
    %496 = vmatpush1.msra.mxu0 %v487
    %497 = vmatprep.subr.mxu0 0.0
    %498 = vmatpush1.msra.mxu0 %v486
    %499 = vmatprep.subr.mxu0 0.0
    %500 = vmatpush1.msra.mxu0 %v485
    %501 = vmatprep.subr.mxu0 0.0
    %502 = vmatpush1.msra.mxu0 %v484
    %503 = vmatprep.subr.mxu0 0.0
    %504 = vmatpush1.msra.mxu0 %v483
    %505 = vmatprep.subr.mxu0 0.0
    %506 = vmatpush1.msra.mxu0 %v482
    %507 = vmatprep.subr.mxu0 0.0
    %508 = vmatpush1.msra.mxu0 %v481
    %509 = vmatprep.subr.mxu0 0.0
    %510 = vmatpush1.msra.mxu0 %v480
    %511 = vmatprep.subr.mxu0 0.0
    %512 = vmatpush1.msra.mxu0 %v479
    %513 = vmatprep.subr.mxu0 0.0
    %514 = vmatpush1.msra.mxu0 %v478
    %515 = vmatprep.subr.mxu0 0.0
    %516 = vmatpush1.msra.mxu0 %v477
    %517 = vmatprep.subr.mxu0 0.0
    %518 = vmatpush1.msra.mxu0 %v476
    %519 = vmatprep.subr.mxu0 0.0
    %520 = vmatpush1.msra.mxu0 %v475
    %521 = vmatprep.subr.mxu0 0.0
    %522 = vmatpush1.msra.mxu0 %v474
    %523 = vmatprep.subr.mxu0 0.0
    %524 = vmatpush1.msra.mxu0 %v473
    %525 = vmatprep.subr.mxu0 0.0
    %526 = vmatpush1.msra.mxu0 %v472
    %527 = vmatprep.subr.mxu0 0.0
    %528 = vmatpush2.msra.mxu0 0.0
    %529 = vmatprep.subr.mxu0 0.0
    %530 = vmatpush2.msra.mxu0 0.0
    %531 = vmatprep.subr.mxu0 0.0
    %532 = vmatpush2.msra.mxu0 0.0
    %533 = vmatprep.subr.mxu0 0.0
    %534 = vmatpush2.msra.mxu0 0.0
    %535 = vmatprep.subr.mxu0 0.0
    %536 = vmatpush2.msra.mxu0 0.0
    %537 = vmatprep.subr.mxu0 0.0
    %538 = vmatpush2.msra.mxu0 0.0
    %539 = vmatprep.subr.mxu0 0.0
    %540 = vmatpush2.msra.mxu0 0.0
    %541 = vmatprep.subr.mxu0 0.0
    %542 = vmatpush2.msra.mxu0 0.0
    %543 = vmatprep.subr.mxu0 0.0
    %544 = vmatpush2.msra.mxu0 0.0
    %545 = vmatprep.subr.mxu0 0.0
    %546 = vmatpush2.msra.mxu0 0.0
    %547 = vmatprep.subr.mxu0 0.0
    %548 = vmatpush2.msra.mxu0 0.0
    %549 = vmatprep.subr.mxu0 0.0
    %550 = vmatpush2.msra.mxu0 0.0
    %551 = vmatprep.subr.mxu0 0.0
    %552 = vmatpush2.msra.mxu0 0.0
    %553 = vmatprep.subr.mxu0 0.0
    %554 = vmatpush2.msra.mxu0 0.0
    %555 = vmatprep.subr.mxu0 0.0
    %556 = vmatpush2.msra.mxu0 0.0
    %557 = vmatprep.subr.mxu0 0.0
    %558 = vmatpush2.msra.mxu0 0.0
    %559 = vmatprep.mubr.f32.mxu0 0.0
    %560 = vmatmul.mubr.f32.gmra.mxu0 %v471
    %v561 = vpop.f32.mrf.mxu0
    %v562 = vadd.f32 %v493, %v561
    %v563 = vpop.f32.mrf.mxu0
    %564 = vdwg.mxu0
    %565 = vst [vmem:[#allocation8] sm:$0xff] %v562
    // Predicated region
    $region38: #{tpu_custom_call.1} parent=1 // pred_check
      _
    $region39: #{tpu_custom_call.1} parent=1 // pred_check_branch
      %567 = sbr.rel (0) target = $region41
    $region40: #{tpu_custom_call.1} parent=1 // pred_region
      %s569 = ssub.s32 128, 128
      %570 = vsyncadd [#allocation4], %s569
      %s572 = sshll.u32 [#allocation8], 4
      %s573 = int_to_ptr.vmem [resolvable:$true] %s572
      %575 = dma.vmem_to_hbm [thread:$0]  %s573, 128, %s6, [#allocation4]
    $region41: #{tpu_custom_call.1} parent=1 // pred_fallthru
      _
    // Predicated region
    $region42: #{tpu_custom_call.1} parent=1 // pred_check
      _
    $region43: #{tpu_custom_call.1} parent=1 // pred_check_branch
      %577 = sbr.rel (0) target = $region45
    $region44: #{tpu_custom_call.1} parent=1 // pred_region
      %578 = dma.done [#allocation4], 128
    $region45: #{tpu_custom_call.1} parent=1 // pred_fallthru
      _
    %579 = vsyncpa [#allocation3], 1
    %580 = vsyncpa [#allocation6], 1
    %581 = vsyncpa [#allocation4], 1

</llo_original>
